<compile_context>
chip_gen: v7x
topology: tpu7x:2x2x1
jax: 0.10.0
libtpu: 0.0.40
codegen_flags: <defaults>
</compile_context>

<pallas_src>
import math
from functools import lru_cache, partial

import jax
import jax.numpy as jnp
from jax.experimental import pallas as pl
from jax.experimental.pallas import tpu as pltpu


def _round_up(x, m):
    return (x + m - 1) // m * m


@lru_cache(maxsize=1)
def _tpu_defaults():
    """Chip-aware defaults: (tm, tk, vmem_capacity_bytes, num_tensorcores)."""
    tm, tk, n_tc = 512, 512, 1          # v5e / v6e style defaults (128 MiB VMEM)
    vmem_cap = 64 * 1024 * 1024         # conservative fallback (v7x physical)
    kind = ""
    try:
        kind = jax.devices()[0].device_kind.lower()
    except Exception:
        pass
    try:
        cap = getattr(pltpu.get_tpu_info(), "vmem_capacity_bytes", None)
        if cap:
            vmem_cap = int(cap)
    except Exception:
        if any(t in kind for t in ("v5", "v6")):
            vmem_cap = 128 * 1024 * 1024
    if ("v7" in kind) or ("7x" in kind):
        # v7x: 64 MiB VMEM / TC, ~3.2 TB/s HBM, 2 TensorCores per chip.
        tm, tk, n_tc = 384, 256, 2
        vmem_cap = min(vmem_cap, 64 * 1024 * 1024)
    return tm, tk, vmem_cap, n_tc


def _ffn_kernel(x_ref, w1_ref, w2_ref, o_ref, acc_ref):
    # x_ref  : (tm, Hp)  row tile of flattened input (resident across k steps)
    # w1_ref : (Hp, tk)  column slab of linear_in weight  (streamed over k)
    # w2_ref : (tk, Hp)  row slab of linear_out weight    (streamed over k)
    # o_ref  : (tm, Hp)  output tile (written on last k step)
    # acc_ref: (tm, Hp)  fp32 accumulator (VMEM scratch, persists across k)
    k = pl.program_id(1)

    @pl.when(k == 0)
    def _():
        acc_ref[...] = jnp.zeros_like(acc_ref)

    # first matmul + ReLU (fp32 accumulate on the MXU, ReLU on fp32 values)
    h = jnp.dot(x_ref[...], w1_ref[...], preferred_element_type=jnp.float32)
    h = jnp.maximum(h, 0.0)

    # dropout (eval mode) == identity
    acc_ref[...] += jnp.dot(h.astype(w2_ref.dtype), w2_ref[...],
                            preferred_element_type=jnp.float32)

    @pl.when(k == pl.num_programs(1) - 1)
    def _():
        o_ref[...] = acc_ref[...].astype(o_ref.dtype)


def prepare_ffn_params(w_in, w_out, *, tk=None, lane=128,
                       compute_dtype=jnp.bfloat16):
    """One-time parameter prep, OUTSIDE the jitted hot path.

    w_in : (inner, hidden)  torch linear_in.weight layout
    w_out: (hidden, inner)  torch linear_out.weight layout
    Returns (w1, w2, tk_eff):
      w1: (Hp, Ip) = w_in.T  padded, w2: (Ip, Hp) = w_out.T padded,
      tk_eff: inner-dim tile size (multiple of 128, divides Ip).
    Zero-padding is exact: relu(0)=0 and padded W2 rows/cols are zero.
    bf16 weights are the production default (fp32 accumulation in-kernel);
    pass compute_dtype=jnp.float32 for a full-precision path.
    """
    inner, hidden = w_in.shape
    assert w_out.shape == (hidden, inner)

    if tk is None:
        _, tk, _, _ = _tpu_defaults()     # 512 on v5e/v6e, 256 on v7x
    Hp = _round_up(hidden, lane)
    tk_eff = min(_round_up(tk, lane), _round_up(inner, lane))
    Ip = _round_up(inner, tk_eff)

    w1 = jnp.asarray(w_in).T   # (hidden, inner)
    w2 = jnp.asarray(w_out).T  # (inner, hidden)
    w1 = jnp.pad(w1, ((0, Hp - hidden), (0, Ip - inner)))
    w2 = jnp.pad(w2, ((0, Ip - inner), (0, Hp - hidden)))
    if compute_dtype is not None:
        w1 = w1.astype(compute_dtype)
        w2 = w2.astype(compute_dtype)
    return w1, w2, tk_eff


def feed_forward(x, w1, w2, *, tk, tm=None, out_dtype=None):
    """x: [..., hidden]; w1/w2: pre-transposed, padded weights from
    prepare_ffn_params. Compute dtype follows the weight dtype; output dtype
    defaults to the compute dtype (bf16 weights -> bf16 output)."""
    orig_shape = x.shape
    H = orig_shape[-1]
    Hp, Ip = w1.shape
    assert w2.shape == (Ip, Hp)
    assert Ip % tk == 0

    tm_def, _, vmem_cap, n_tc = _tpu_defaults()
    if tm is None:
        tm = tm_def
    compute_dtype = w1.dtype
    if out_dtype is None:
        out_dtype = compute_dtype
    if x.dtype != compute_dtype:
        x = x.astype(compute_dtype)

    M = math.prod(orig_shape[:-1])
    x2 = x.reshape(M, H)

    # Row tile: shrink for tiny inputs, keep it sublane (8) aligned.
    tm_eff = min(tm, _round_up(M, 8))
    # Multi-TensorCore chips (v7x): make sure the "parallel" M axis has >= 2
    # tiles so the second core is not idle.
    if n_tc > 1 and _round_up(M, tm_eff) // tm_eff < n_tc and tm_eff >= 16:
        tm_eff = max(8, _round_up((tm_eff + 1) // 2, 8))

    in_isz = jnp.dtype(compute_dtype).itemsize
    w_isz = jnp.dtype(w1.dtype).itemsize
    out_isz = jnp.dtype(out_dtype).itemsize

    def _budget(t):
        # double-buffered x / W1 / W2 / out tiles + fp32 accumulator
        return (2 * (t * Hp * in_isz
                     + Hp * tk * w_isz
                     + tk * Hp * w_isz
                     + t * Hp * out_isz)
                + t * Hp * 4)

    vmem_limit_cap = int(0.9 * vmem_cap)
    # If the working set would not fit (e.g. v7x's 64 MiB), shrink the row
    # tile; tk (weight-slab width) is never reduced, per perf review.
    while _budget(tm_eff) > vmem_limit_cap and tm_eff > 8:
        tm_eff = max(8, _round_up(tm_eff // 2, 8))
    # TODO(synk): if VMEM is still the blocker, pipeline_mode=pl.Buffered(1)
    # on the x / out BlockSpecs (their block index only changes with i, not k)
    # reclaims one buffer each; pl.Buffered(3) on W1/W2 can hide the i-boundary
    # DMA bubble on 128 MiB parts (v6e).

    Mp = _round_up(M, tm_eff)
    if Mp != M or Hp != H:
        x2 = jnp.pad(x2, ((0, Mp - M), (0, Hp - H)))

    n_m = Mp // tm_eff
    n_k = Ip // tk

    vmem_limit = int(min(vmem_limit_cap,
                         max(1.25 * _budget(tm_eff), 32 * 1024 * 1024)))

    cost = pl.CostEstimate(
        flops=4 * Mp * Hp * Ip,                       # two matmuls
        transcendentals=0,
        bytes_accessed=(Mp * Hp * in_isz              # x read once
                        + n_m * 2 * Hp * Ip * w_isz   # weights re-streamed / row tile
                        + Mp * Hp * out_isz),         # output write
    )

    out = pl.pallas_call(
        _ffn_kernel,
        out_shape=jax.ShapeDtypeStruct((Mp, Hp), out_dtype),
        grid_spec=pltpu.PrefetchScalarGridSpec(
            num_scalar_prefetch=0,
            grid=(n_m, n_k),                                      # reduction last
            in_specs=[
                pl.BlockSpec((tm_eff, Hp), lambda i, k: (i, 0)),  # x row tile
                pl.BlockSpec((Hp, tk), lambda i, k: (0, k)),      # W1 column slab
                pl.BlockSpec((tk, Hp), lambda i, k: (k, 0)),      # W2 row slab
            ],
            out_specs=pl.BlockSpec((tm_eff, Hp), lambda i, k: (i, 0)),
            scratch_shapes=[pltpu.VMEM((tm_eff, Hp), jnp.float32)],
        ),
        compiler_params=pltpu.CompilerParams(
            dimension_semantics=("parallel", "arbitrary"),
            vmem_limit_bytes=vmem_limit,
        ),
        cost_estimate=cost,
    )(x2, w1, w2)

    return out[:M, :H].reshape(orig_shape)


def xavier_uniform(key, shape):
    # matches torch.nn.init.xavier_uniform_ for a 2D weight (fan_out, fan_in)
    fan_out, fan_in = shape
    bound = math.sqrt(6.0 / (fan_in + fan_out))
    return jax.random.uniform(key, shape, jnp.float32, -bound, bound)


if __name__ == "__main__":
    hidden_size = 32
    inner_size = 64
    batch, seq = 2, 8

    key = jax.random.PRNGKey(0)
    k_x, k_w1, k_w2 = jax.random.split(key, 3)

    x = jax.random.normal(k_x, (batch, seq, hidden_size), jnp.float32)
    # PyTorch layout: linear_in.weight [inner, hidden], linear_out.weight [hidden, inner]
    w_in = xavier_uniform(k_w1, (inner_size, hidden_size))
    w_out = xavier_uniform(k_w2, (hidden_size, inner_size))

    # pure-JAX reference (eval-mode dropout == identity)
    ref = jnp.maximum(x @ w_in.T, 0.0) @ w_out.T

    # --- fp32 path (tight tolerance) ---
    w1, w2, tk = prepare_ffn_params(w_in, w_out, compute_dtype=jnp.float32)
    ffn = jax.jit(partial(feed_forward, tk=tk))
    y = jax.block_until_ready(ffn(x, w1, w2))
    assert y.shape == (batch, seq, hidden_size)
    assert y.dtype == jnp.float32
    assert jnp.allclose(y, ref, atol=1e-5, rtol=1e-5)

    # --- production default: bf16 operands + bf16 output, fp32 accumulation ---
    w1b, w2b, tkb = prepare_ffn_params(w_in, w_out)   # bf16 by default
    yb = jax.block_until_ready(feed_forward(x, w1b, w2b, tk=tkb))
    assert yb.shape == (batch, seq, hidden_size)
    assert yb.dtype == jnp.bfloat16
    assert jnp.allclose(yb.astype(jnp.float32), ref, atol=5e-2, rtol=5e-2)

    print("KERNEL_OK")
</pallas_src>

<mosaic_0001>
module attributes {stable_mosaic.version = 11 : i64} {
  func.func @_ffn_kernel(%arg0: i32, %arg1: i32, %arg2: memref<16x128xf32, #tpu.memory_space<vmem>>, %arg3: memref<128x128xf32, #tpu.memory_space<vmem>>, %arg4: memref<128x128xf32, #tpu.memory_space<vmem>>, %arg5: memref<16x128xf32, #tpu.memory_space<vmem>>, %arg6: memref<16x128xf32, #tpu.memory_space<vmem>>) attributes {dimension_semantics = [#tpu.dimension_semantics<parallel>, #tpu.dimension_semantics<arbitrary>], iteration_bounds = array<i64: 1, 1>, scalar_prefetch = 0 : i64, scratch_operands = 1 : i64, tpu.core_type = #tpu.core_type<tc>, window_params = [{transform_indices = @transform_0, window_bounds = array<i64: 16, 128>}, {transform_indices = @transform_1, window_bounds = array<i64: 128, 128>}, {transform_indices = @transform_2, window_bounds = array<i64: 128, 128>}, {transform_indices = @transform_3, window_bounds = array<i64: 16, 128>}]} {
    %c0_i32 = arith.constant 0 : i32
    %0 = arith.cmpi eq, %arg1, %c0_i32 : i32
    %1 = arith.extui %0 : i1 to i32
    %c0_i32_0 = arith.constant 0 : i32
    %2 = arith.cmpi ne, %1, %c0_i32_0 : i32
    scf.if %2 {
      %cst_14 = arith.constant 0.000000e+00 : f32
      %16 = vector.broadcast %cst_14 : f32 to vector<16x128xf32>
      %c0_15 = arith.constant 0 : index
      %c0_16 = arith.constant 0 : index
      %17 = vector.load %arg6[%c0_15, %c0_16] : memref<16x128xf32, #tpu.memory_space<vmem>>, vector<16x128xf32>
      tpu.vector_store %arg6[%c0_15, %c0_16], %16 {strides = array<i32>} : memref<16x128xf32, #tpu.memory_space<vmem>>, vector<16x128xf32>,
    } else {
    }
    %c0 = arith.constant 0 : index
    %c0_1 = arith.constant 0 : index
    %3 = vector.load %arg2[%c0, %c0_1] : memref<16x128xf32, #tpu.memory_space<vmem>>, vector<16x128xf32>
    %c0_2 = arith.constant 0 : index
    %c0_3 = arith.constant 0 : index
    %4 = vector.load %arg3[%c0_2, %c0_3] : memref<128x128xf32, #tpu.memory_space<vmem>>, vector<128x128xf32>
    %cst = arith.constant dense<0.000000e+00> : vector<16x128xf32>
    %5 = tpu.matmul %3, %4, %cst {dimension_numbers = #tpu.dot_dimension_numbers<[1], [0], [0], [1], [0, 0, 1, 1], [], []>} : vector<16x128xf32>, vector<128x128xf32>, vector<16x128xf32> -> vector<16x128xf32>
    %cst_4 = arith.constant 0.000000e+00 : f32
    %6 = vector.broadcast %cst_4 : f32 to vector<16x128xf32>
    %7 = arith.maximumf %5, %6 : vector<16x128xf32>
    %c0_5 = arith.constant 0 : index
    %c0_6 = arith.constant 0 : index
    %8 = vector.load %arg6[%c0_5, %c0_6] : memref<16x128xf32, #tpu.memory_space<vmem>>, vector<16x128xf32>
    %c0_7 = arith.constant 0 : index
    %c0_8 = arith.constant 0 : index
    %9 = vector.load %arg4[%c0_7, %c0_8] : memref<128x128xf32, #tpu.memory_space<vmem>>, vector<128x128xf32>
    %cst_9 = arith.constant dense<0.000000e+00> : vector<16x128xf32>
    %10 = tpu.matmul %7, %9, %cst_9 {dimension_numbers = #tpu.dot_dimension_numbers<[1], [0], [0], [1], [0, 0, 1, 1], [], []>} : vector<16x128xf32>, vector<128x128xf32>, vector<16x128xf32> -> vector<16x128xf32>
    %11 = arith.addf %8, %10 : vector<16x128xf32>
    %c0_10 = arith.constant 0 : index
    %c0_11 = arith.constant 0 : index
    %12 = vector.load %arg6[%c0_10, %c0_11] : memref<16x128xf32, #tpu.memory_space<vmem>>, vector<16x128xf32>
    tpu.vector_store %arg6[%c0_10, %c0_11], %11 {strides = array<i32>} : memref<16x128xf32, #tpu.memory_space<vmem>>, vector<16x128xf32>,
    %c0_i32_12 = arith.constant 0 : i32
    %13 = arith.cmpi eq, %arg1, %c0_i32_12 : i32
    %14 = arith.extui %13 : i1 to i32
    %c0_i32_13 = arith.constant 0 : i32
    %15 = arith.cmpi ne, %14, %c0_i32_13 : i32
    scf.if %15 {
      %c0_14 = arith.constant 0 : index
      %c0_15 = arith.constant 0 : index
      %16 = vector.load %arg6[%c0_14, %c0_15] : memref<16x128xf32, #tpu.memory_space<vmem>>, vector<16x128xf32>
      %c0_16 = arith.constant 0 : index
      %c0_17 = arith.constant 0 : index
      %17 = vector.load %arg5[%c0_16, %c0_17] : memref<16x128xf32, #tpu.memory_space<vmem>>, vector<16x128xf32>
      tpu.vector_store %arg5[%c0_16, %c0_17], %16 {strides = array<i32>} : memref<16x128xf32, #tpu.memory_space<vmem>>, vector<16x128xf32>,
    } else {
    }
    return
  }
  func.func @transform_0(%arg0: i32, %arg1: i32) -> (i32, i32) {
    %c0_i32 = arith.constant 0 : i32
    %c0_i32_0 = arith.constant 0 : i32
    return %arg0, %c0_i32 : i32, i32
  }
  func.func @transform_1(%arg0: i32, %arg1: i32) -> (i32, i32) {
    %c0_i32 = arith.constant 0 : i32
    %c0_i32_0 = arith.constant 0 : i32
    return %c0_i32, %arg1 : i32, i32
  }
  func.func @transform_2(%arg0: i32, %arg1: i32) -> (i32, i32) {
    %c0_i32 = arith.constant 0 : i32
    %c0_i32_0 = arith.constant 0 : i32
    return %arg1, %c0_i32 : i32, i32
  }
  func.func @transform_3(%arg0: i32, %arg1: i32) -> (i32, i32) {
    %c0_i32 = arith.constant 0 : i32
    %c0_i32_0 = arith.constant 0 : i32
    return %arg0, %c0_i32 : i32, i32
  }
}

</mosaic_0001>

<llo_original>
// kernel: feed_forward.1
$region0: #{feed_forward.1}
  #allocation0 [shape = 'u32[]', space=smem, size = 0x4, offset = 0x4, fixed_abs, tag = 'smem constant byte address 0x4 - core index']
  #allocation1 [shape = 'u32[144,128]{1,0:T(1,128)}', space=vmem, size = 0x12000, scoped, tag = 'internal scratch']
  #allocation2 [shape = 'f32[16,128]{1,0:T(8,128)}', space=vmem, size = 0x2000, scoped, tag = 'scratch operand']
  %s0 = inlined_call_operand.vmem [shape: f32[16,128], index: 0, kind: input, shape index: {}]
  %s1 = inlined_call_operand.hbm [shape: f32[128,128], index: 1, kind: input, shape index: {}]
  %s2 = inlined_call_operand.hbm [shape: f32[128,128], index: 2, kind: input, shape index: {}]
  %s3 = inlined_call_operand.vmem [shape: f32[16,128], index: 3, kind: output, shape index: {}]
  %s4 = sld [smem:[#allocation0]]
  $region38: #{feed_forward.1} parent=0
    _
  %s6 = ssub.s32 1, %s4
  %s7 = scalar_select 0, %s6, %s4
  $region1: #{feed_forward.1} parent=0
    #allocation3 [shape = 'u8[65536]{0}', space=vmem, size = 0x10000, scoped, tag = 'input window, operand 1, single buffered']
    #allocation4 [shape = 's32[1]{0}', space=sflag, size = 0x4, scoped, tag = 'scoped memory for feed_forward.1']
    #allocation5 [shape = 'u8[65536]{0}', space=vmem, size = 0x10000, scoped, tag = 'input window, operand 2, single buffered']
    #allocation6 [shape = 's32[1]{0}', space=sflag, size = 0x4, scoped, tag = 'scoped memory for feed_forward.1']
    %8 = vsyncpa [#allocation4], 0
    %9 = vsyncpa [#allocation6], 0
    // Predicated region
    $region2: #{feed_forward.1} parent=1 // pred_check
      _
    $region3: #{feed_forward.1} parent=1 // pred_check_branch
      %11 = sbr.rel (0) target = $region5
    $region4: #{feed_forward.1} parent=1 // pred_region
      _
    $region5: #{feed_forward.1} parent=1 // pred_fallthru
      _
    // Predicated region
    $region6: #{feed_forward.1} parent=1 // pred_check
      _
    $region7: #{feed_forward.1} parent=1 // pred_check_branch
      %13 = sbr.rel (0) target = $region9
    $region8: #{feed_forward.1} parent=1 // pred_region
      %s15 = ssub.s32 2048, 2048
      %16 = vsyncadd [#allocation4], %s15
      %s17 = sshll.u32 [#allocation3], 4
      %s18 = int_to_ptr.vmem [resolvable:$true] %s17
      %23 = dma.hbm_to_vmem [thread:$0]  %s1, 2048, %s18, [#allocation4], 128, 128, 8
    $region9: #{feed_forward.1} parent=1 // pred_fallthru
      _
    // Predicated region
    $region10: #{feed_forward.1} parent=1 // pred_check
      _
    $region11: #{feed_forward.1} parent=1 // pred_check_branch
      %25 = sbr.rel (0) target = $region13
    $region12: #{feed_forward.1} parent=1 // pred_region
      %s27 = ssub.s32 2048, 2048
      %28 = vsyncadd [#allocation6], %s27
      %s29 = sshll.u32 [#allocation5], 4
      %s30 = int_to_ptr.vmem [resolvable:$true] %s29
      %35 = dma.hbm_to_vmem [thread:$0]  %s2, 2048, %s30, [#allocation6], 128, 128, 8
    $region13: #{feed_forward.1} parent=1 // pred_fallthru
      _
    // Predicated region
    $region14: #{feed_forward.1} parent=1 // pred_check
      _
    $region15: #{feed_forward.1} parent=1 // pred_check_branch
      %37 = sbr.rel (0) target = $region17
    $region16: #{feed_forward.1} parent=1 // pred_region
      %38 = dma.done [#allocation4], 2048
    $region17: #{feed_forward.1} parent=1 // pred_fallthru
      _
    // Predicated region
    $region18: #{feed_forward.1} parent=1 // pred_check
      _
    $region19: #{feed_forward.1} parent=1 // pred_check_branch
      %40 = sbr.rel (0) target = $region21
    $region20: #{feed_forward.1} parent=1 // pred_region
      %41 = dma.done [#allocation6], 2048
    $region21: #{feed_forward.1} parent=1 // pred_fallthru
      _
    %p42 = scmp.eq.s32.totalorder 0, 0
    // Predicated region
    $region22: #{feed_forward.1} parent=1 // pred_check
      %p43 = pneg %p42
    $region23: #{feed_forward.1} parent=1 // pred_check_branch
      %45 = sbr.rel (%p43) target = $region25
    $region24: #{feed_forward.1} parent=1 // pred_region
      %46 = vst [vmem:[#allocation2] sm:$0xff] 0.0
      %47 = vst [vmem:[#allocation2 + $0x8] sm:$0xff] 0.0
    $region25: #{feed_forward.1} parent=1 // pred_fallthru
      _
    %v48 = vld [vmem:[%s0] sm:$0xff]
    %v49 = vld [vmem:[%s0 + $0x8] sm:$0xff]
    %v50 = vld [vmem:[#allocation3] sm:$0xff]
    %v51 = vld [vmem:[#allocation3 + $0x8] sm:$0xff]
    %v52 = vld [vmem:[#allocation3 + $0x10] sm:$0xff]
    %v53 = vld [vmem:[#allocation3 + $0x18] sm:$0xff]
    %v54 = vld [vmem:[#allocation3 + $0x20] sm:$0xff]
    %v55 = vld [vmem:[#allocation3 + $0x28] sm:$0xff]
    %v56 = vld [vmem:[#allocation3 + $0x30] sm:$0xff]
    %v57 = vld [vmem:[#allocation3 + $0x38] sm:$0xff]
    %v58 = vld [vmem:[#allocation3 + $0x40] sm:$0xff]
    %v59 = vld [vmem:[#allocation3 + $0x48] sm:$0xff]
    %v60 = vld [vmem:[#allocation3 + $0x50] sm:$0xff]
    %v61 = vld [vmem:[#allocation3 + $0x58] sm:$0xff]
    %v62 = vld [vmem:[#allocation3 + $0x60] sm:$0xff]
    %v63 = vld [vmem:[#allocation3 + $0x68] sm:$0xff]
    %v64 = vld [vmem:[#allocation3 + $0x70] sm:$0xff]
    %v65 = vld [vmem:[#allocation3 + $0x78] sm:$0xff]
    %66 = vmatprep.subr.mxu0 0.0
    %67 = vmatpush1.msra.mxu0 %v50
    %68 = vmatprep.subr.mxu0 0.0
    %69 = vmatpush1.msra.mxu0 %v51
    %70 = vmatprep.subr.mxu0 0.0
    %71 = vmatpush1.msra.mxu0 %v52
    %72 = vmatprep.subr.mxu0 0.0
    %73 = vmatpush1.msra.mxu0 %v53
    %74 = vmatprep.subr.mxu0 0.0
    %75 = vmatpush1.msra.mxu0 %v54
    %76 = vmatprep.subr.mxu0 0.0
    %77 = vmatpush1.msra.mxu0 %v55
    %78 = vmatprep.subr.mxu0 0.0
    %79 = vmatpush1.msra.mxu0 %v56
    %80 = vmatprep.subr.mxu0 0.0
    %81 = vmatpush1.msra.mxu0 %v57
    %82 = vmatprep.subr.mxu0 0.0
    %83 = vmatpush1.msra.mxu0 %v58
    %84 = vmatprep.subr.mxu0 0.0
    %85 = vmatpush1.msra.mxu0 %v59
    %86 = vmatprep.subr.mxu0 0.0
    %87 = vmatpush1.msra.mxu0 %v60
    %88 = vmatprep.subr.mxu0 0.0
    %89 = vmatpush1.msra.mxu0 %v61
    %90 = vmatprep.subr.mxu0 0.0
    %91 = vmatpush1.msra.mxu0 %v62
    %92 = vmatprep.subr.mxu0 0.0
    %93 = vmatpush1.msra.mxu0 %v63
    %94 = vmatprep.subr.mxu0 0.0
    %95 = vmatpush1.msra.mxu0 %v64
    %96 = vmatprep.subr.mxu0 0.0
    %97 = vmatpush1.msra.mxu0 %v65
    %98 = vmatprep.subr.mxu0 0.0
    %99 = vmatpush1.msra.mxu0 0.0
    %100 = vmatprep.subr.mxu0 0.0
    %101 = vmatpush1.msra.mxu0 0.0
    %102 = vmatprep.subr.mxu0 0.0
    %103 = vmatpush1.msra.mxu0 0.0
    %104 = vmatprep.subr.mxu0 0.0
    %105 = vmatpush1.msra.mxu0 0.0
    %106 = vmatprep.subr.mxu0 0.0
    %107 = vmatpush1.msra.mxu0 0.0
    %108 = vmatprep.subr.mxu0 0.0
    %109 = vmatpush1.msra.mxu0 0.0
    %110 = vmatprep.subr.mxu0 0.0
    %111 = vmatpush1.msra.mxu0 0.0
    %112 = vmatprep.subr.mxu0 0.0
    %113 = vmatpush1.msra.mxu0 0.0
    %114 = vmatprep.subr.mxu0 0.0
    %115 = vmatpush1.msra.mxu0 0.0
    %116 = vmatprep.subr.mxu0 0.0
    %117 = vmatpush1.msra.mxu0 0.0
    %118 = vmatprep.subr.mxu0 0.0
    %119 = vmatpush1.msra.mxu0 0.0
    %120 = vmatprep.subr.mxu0 0.0
    %121 = vmatpush1.msra.mxu0 0.0
    %122 = vmatprep.subr.mxu0 0.0
    %123 = vmatpush1.msra.mxu0 0.0
    %124 = vmatprep.subr.mxu0 0.0
    %125 = vmatpush1.msra.mxu0 0.0
    %126 = vmatprep.subr.mxu0 0.0
    %127 = vmatpush1.msra.mxu0 0.0
    %128 = vmatprep.subr.mxu0 0.0
    %129 = vmatpush1.msra.mxu0 0.0
    %130 = vmatprep.mubr.f32.mxu0 0.0
    %131 = vmatmul.mubr.f32.gmra.mrb[0].mxu0 %v48
    %v132 = vpop.f32.mrb[0].mxu0
    %v133 = vadd.f32 0.0, %v132
    %v134 = vpop.f32.mrb[0].mxu0
    %135 = vmatprep.mubr.f32.mxu0 0.0
    %136 = vmatmul.mubr.f32.gmra.mrb[0].mxu0 %v49
    %v137 = vpop.f32.mrb[0].mxu0
    %v138 = vadd.f32 0.0, %v137
    %v139 = vpop.f32.mrb[0].mxu0
    %140 = vdwg.mxu0
    %v141 = vmax.f32 %v133, 0.0
    %v142 = vmax.f32 %v138, 0.0
    %v143 = vld [vmem:[#allocation2] sm:$0xff]
    %v144 = vld [vmem:[#allocation2 + $0x8] sm:$0xff]
    %v145 = vld [vmem:[#allocation5] sm:$0xff]
    %v146 = vld [vmem:[#allocation5 + $0x8] sm:$0xff]
    %v147 = vld [vmem:[#allocation5 + $0x10] sm:$0xff]
    %v148 = vld [vmem:[#allocation5 + $0x18] sm:$0xff]
    %v149 = vld [vmem:[#allocation5 + $0x20] sm:$0xff]
    %v150 = vld [vmem:[#allocation5 + $0x28] sm:$0xff]
    %v151 = vld [vmem:[#allocation5 + $0x30] sm:$0xff]
    %v152 = vld [vmem:[#allocation5 + $0x38] sm:$0xff]
    %v153 = vld [vmem:[#allocation5 + $0x40] sm:$0xff]
    %v154 = vld [vmem:[#allocation5 + $0x48] sm:$0xff]
    %v155 = vld [vmem:[#allocation5 + $0x50] sm:$0xff]
    %v156 = vld [vmem:[#allocation5 + $0x58] sm:$0xff]
    %v157 = vld [vmem:[#allocation5 + $0x60] sm:$0xff]
    %v158 = vld [vmem:[#allocation5 + $0x68] sm:$0xff]
    %v159 = vld [vmem:[#allocation5 + $0x70] sm:$0xff]
    %v160 = vld [vmem:[#allocation5 + $0x78] sm:$0xff]
    %161 = vmatprep.subr.mxu0 0.0
    %162 = vmatpush1.msra.mxu0 %v145
    %163 = vmatprep.subr.mxu0 0.0
    %164 = vmatpush1.msra.mxu0 %v146
    %165 = vmatprep.subr.mxu0 0.0
    %166 = vmatpush1.msra.mxu0 %v147
    %167 = vmatprep.subr.mxu0 0.0
    %168 = vmatpush1.msra.mxu0 %v148
    %169 = vmatprep.subr.mxu0 0.0
    %170 = vmatpush1.msra.mxu0 %v149
    %171 = vmatprep.subr.mxu0 0.0
    %172 = vmatpush1.msra.mxu0 %v150
    %173 = vmatprep.subr.mxu0 0.0
    %174 = vmatpush1.msra.mxu0 %v151
    %175 = vmatprep.subr.mxu0 0.0
    %176 = vmatpush1.msra.mxu0 %v152
    %177 = vmatprep.subr.mxu0 0.0
    %178 = vmatpush1.msra.mxu0 %v153
    %179 = vmatprep.subr.mxu0 0.0
    %180 = vmatpush1.msra.mxu0 %v154
    %181 = vmatprep.subr.mxu0 0.0
    %182 = vmatpush1.msra.mxu0 %v155
    %183 = vmatprep.subr.mxu0 0.0
    %184 = vmatpush1.msra.mxu0 %v156
    %185 = vmatprep.subr.mxu0 0.0
    %186 = vmatpush1.msra.mxu0 %v157
    %187 = vmatprep.subr.mxu0 0.0
    %188 = vmatpush1.msra.mxu0 %v158
    %189 = vmatprep.subr.mxu0 0.0
    %190 = vmatpush1.msra.mxu0 %v159
    %191 = vmatprep.subr.mxu0 0.0
    %192 = vmatpush1.msra.mxu0 %v160
    %193 = vmatprep.subr.mxu0 0.0
    %194 = vmatpush1.msra.mxu0 0.0
    %195 = vmatprep.subr.mxu0 0.0
    %196 = vmatpush1.msra.mxu0 0.0
    %197 = vmatprep.subr.mxu0 0.0
    %198 = vmatpush1.msra.mxu0 0.0
    %199 = vmatprep.subr.mxu0 0.0
    %200 = vmatpush1.msra.mxu0 0.0
    %201 = vmatprep.subr.mxu0 0.0
    %202 = vmatpush1.msra.mxu0 0.0
    %203 = vmatprep.subr.mxu0 0.0
    %204 = vmatpush1.msra.mxu0 0.0
    %205 = vmatprep.subr.mxu0 0.0
    %206 = vmatpush1.msra.mxu0 0.0
    %207 = vmatprep.subr.mxu0 0.0
    %208 = vmatpush1.msra.mxu0 0.0
    %209 = vmatprep.subr.mxu0 0.0
    %210 = vmatpush1.msra.mxu0 0.0
    %211 = vmatprep.subr.mxu0 0.0
    %212 = vmatpush1.msra.mxu0 0.0
    %213 = vmatprep.subr.mxu0 0.0
    %214 = vmatpush1.msra.mxu0 0.0
    %215 = vmatprep.subr.mxu0 0.0
    %216 = vmatpush1.msra.mxu0 0.0
    %217 = vmatprep.subr.mxu0 0.0
    %218 = vmatpush1.msra.mxu0 0.0
    %219 = vmatprep.subr.mxu0 0.0
    %220 = vmatpush1.msra.mxu0 0.0
    %221 = vmatprep.subr.mxu0 0.0
    %222 = vmatpush1.msra.mxu0 0.0
    %223 = vmatprep.subr.mxu0 0.0
    %224 = vmatpush1.msra.mxu0 0.0
    %225 = vmatprep.mubr.f32.mxu0 0.0
    %226 = vmatmul.mubr.f32.gmra.mrb[0].mxu0 %v141
    %v227 = vpop.f32.mrb[0].mxu0
    %v228 = vadd.f32 0.0, %v227
    %v229 = vpop.f32.mrb[0].mxu0
    %230 = vmatprep.mubr.f32.mxu0 0.0
    %231 = vmatmul.mubr.f32.gmra.mrb[0].mxu0 %v142
    %v232 = vpop.f32.mrb[0].mxu0
    %v233 = vadd.f32 0.0, %v232
    %v234 = vpop.f32.mrb[0].mxu0
    %235 = vdwg.mxu0
    %v236 = vadd.f32 %v143, %v228
    %v237 = vadd.f32 %v144, %v233
    %238 = vst [vmem:[#allocation2] sm:$0xff] %v236
    %239 = vst [vmem:[#allocation2 + $0x8] sm:$0xff] %v237
    // Predicated region
    $region26: #{feed_forward.1} parent=1 // pred_check
      %p240 = pneg %p42
    $region27: #{feed_forward.1} parent=1 // pred_check_branch
      %242 = sbr.rel (%p240) target = $region29
    $region28: #{feed_forward.1} parent=1 // pred_region
      %v243 = vld [vmem:[#allocation2] sm:$0xff]
      %v244 = vld [vmem:[#allocation2 + $0x8] sm:$0xff]
      %245 = vst [vmem:[%s3] sm:$0xff] %v243
      %246 = vst [vmem:[%s3 + $0x8] sm:$0xff] %v244
    $region29: #{feed_forward.1} parent=1 // pred_fallthru
      _
    // Predicated region
    $region30: #{feed_forward.1} parent=1 // pred_check
      _
    $region31: #{feed_forward.1} parent=1 // pred_check_branch
      %248 = sbr.rel (0) target = $region33
    $region32: #{feed_forward.1} parent=1 // pred_region
      _
    $region33: #{feed_forward.1} parent=1 // pred_fallthru
      _
    // Predicated region
    $region34: #{feed_forward.1} parent=1 // pred_check
      _
    $region35: #{feed_forward.1} parent=1 // pred_check_branch
      %250 = sbr.rel (0) target = $region37
    $region36: #{feed_forward.1} parent=1 // pred_region
      _
    $region37: #{feed_forward.1} parent=1 // pred_fallthru
      _
    %251 = vsyncpa [#allocation4], 1
    %252 = vsyncpa [#allocation6], 1

</llo_original>
